<compile_context>
chip_gen: v7x
topology: tpu7x:2x2x1
jax: 0.10.0
libtpu: 0.0.40
codegen_flags: <defaults>
</compile_context>

<pallas_src>
import functools
import math

import jax
import jax.numpy as jnp
from jax.experimental import pallas as pl
from jax.experimental.pallas import tpu as pltpu

EPS = 1e-6


def _layernorm_kernel(scale_ref, x_ref, o_ref, *, n):
    # scale_ref: (1,) f32 scalar-prefetch (SMEM) holding alpha * bias / eps.
    # x_ref / o_ref: (TILE_ROWS, HIDDEN_PADDED) in VMEM.  Padded lanes are zero
    # on input, so one pass of sum / sum-of-squares yields the statistics of
    # the true (unpadded) row; padded output lanes are sliced off outside.
    x = x_ref[...].astype(jnp.float32)

    inv_n = jnp.float32(1.0 / n)
    inv_nm1 = jnp.float32(1.0 / max(n - 1, 1))  # torch.std is unbiased (N-1)

    s = jnp.sum(x, axis=-1, keepdims=True)
    sq = jnp.sum(x * x, axis=-1, keepdims=True)
    mean = s * inv_n
    # var = (sum(x^2) - n*mean^2) / (n-1); clamp rounding-error negatives.
    var = jnp.maximum((sq - mean * s) * inv_nm1, 0.0)

    # rsqrt goes to the EUP (otherwise idle slot); fold everything into one
    # per-row scalar so the epilogue is a single broadcasted vector multiply.
    k = jax.lax.rsqrt(var) * scale_ref[0]
    o_ref[...] = ((x - mean) * k).astype(o_ref.dtype)


def layer_normalization(x, alpha, bias, *, eps=EPS, tile_rows=None):
    """x: (..., hidden). alpha, bias: shape-(1,) scalar params (torch init 1/0)."""
    orig_shape = x.shape
    hidden = orig_shape[-1]
    rows = math.prod(orig_shape[:-1]) if len(orig_shape) > 1 else 1
    x2d = x.reshape(rows, hidden)

    # Lane-pad the feature dim to a multiple of 128 so in-kernel loads and
    # (especially) output stores are lane-dense (unmasked vst).  Zero padding
    # keeps sum / sumsq exact; padded output lanes are sliced off below.
    # TODO(synk): for hidden << 128, folding several rows into the lane dim
    # would avoid the extra pad/slice HBM pass entirely.
    hidden_p = ((hidden + 127) // 128) * 128
    if hidden_p != hidden:
        x2d = jnp.pad(x2d, ((0, 0), (0, hidden_p - hidden)))

    itemsize = x2d.dtype.itemsize
    # sublane packing unit: 8 rows for 4-byte, 16 for bf16, 32 for int8
    sub = max(8, 32 // itemsize)

    if tile_rows is None:
        # Per-row VMEM cost: double-buffered input + output blocks
        # (2 bufs x (in + out) = 4*itemsize) PLUS the two full-tile f32
        # intermediates the kernel materializes (upcast + epilogue = 2*4).
        per_row = (4 * itemsize + 2 * 4) * hidden_p
        budget = 32 * 1024 * 1024
        tile_rows = budget // per_row
        tile_rows = max(sub, min(int(tile_rows), 512))

    # Round tile to the sublane unit and never exceed (rounded-up) row count.
    tile_rows = max(sub, (int(tile_rows) // sub) * sub)
    rows_rounded = ((rows + sub - 1) // sub) * sub
    tile_rows = min(tile_rows, rows_rounded)
    # Guarantee >= 2 grid steps whenever possible so the "parallel" axis can be
    # megacore-sharded across v7x's two TensorCores.
    if rows_rounded >= 2 * sub:
        half = max(sub, ((rows_rounded // 2) // sub) * sub)
        tile_rows = min(tile_rows, half)

    grid = (pl.cdiv(rows, tile_rows),)

    # Scoped-VMEM limit: real need (blocks + f32 temps + headroom), clamped to
    # <=48 MiB (and 3/4 of queried capacity) -- safe on v7x's 64 MiB, above
    # v5e's 16 MiB default.
    block_bytes = tile_rows * hidden_p * itemsize
    f32_temp_bytes = 2 * tile_rows * hidden_p * 4
    vmem_needed = 4 * block_bytes + f32_temp_bytes + (8 << 20)
    try:
        vmem_cap = pltpu.get_tpu_info().vmem_capacity_bytes
        hard_cap = min(48 << 20, (vmem_cap * 3) // 4)
    except Exception:  # pragma: no cover - info query unavailable
        hard_cap = 48 << 20
    vmem_limit = int(min(hard_cap, max(vmem_needed, 16 << 20)))

    # Fold the whole scalar chain into one value: alpha * bias / eps.
    scale = (
        alpha.astype(jnp.float32).reshape(-1)[:1]
        * bias.astype(jnp.float32).reshape(-1)[:1]
        / jnp.float32(eps)
    )

    cost = pl.CostEstimate(
        flops=6 * rows * hidden,
        transcendentals=rows,
        bytes_accessed=2 * rows * hidden * itemsize,
    )

    kernel = functools.partial(_layernorm_kernel, n=hidden)

    # NOTE: when tile_rows does not divide rows, the partial tail block reads
    # unspecified values for the OOB rows; those rows may compute NaN but their
    # stores are masked off, so in-bounds results are unaffected.
    out = pl.pallas_call(
        kernel,
        out_shape=jax.ShapeDtypeStruct((rows, hidden_p), x.dtype),
        grid_spec=pltpu.PrefetchScalarGridSpec(
            num_scalar_prefetch=1,  # scale -> SMEM, no per-step copy
            grid=grid,
            in_specs=[pl.BlockSpec((tile_rows, hidden_p), lambda i, s: (i, 0))],
            out_specs=pl.BlockSpec((tile_rows, hidden_p), lambda i, s: (i, 0)),
        ),
        compiler_params=pltpu.CompilerParams(
            dimension_semantics=("parallel",),
            vmem_limit_bytes=vmem_limit,
        ),
        cost_estimate=cost,
    )(scale, x2d)

    if hidden_p != hidden:
        out = out[:, :hidden]
    return out.reshape(orig_shape)


if __name__ == "__main__":
    key = jax.random.PRNGKey(0)
    batch, seq, hidden = 2, 8, 32
    x = jax.random.normal(key, (batch, seq, hidden), dtype=jnp.float32)

    def _ref(x, a, b):
        mean = jnp.mean(x, axis=-1, keepdims=True)
        std = jnp.sqrt(
            jnp.sum((x - mean) ** 2, axis=-1, keepdims=True) / (hidden - 1)
        )
        return a[0] * (x - mean) / (std * EPS) * b[0]

    # 1) Default parameter init, matching nn.Parameter(torch.ones(1)/zeros(1)).
    alpha = jnp.ones((1,), dtype=jnp.float32)
    bias = jnp.zeros((1,), dtype=jnp.float32)
    out = jax.block_until_ready(layer_normalization(x, alpha, bias))
    assert out.shape == x.shape
    assert jnp.allclose(out, _ref(x, alpha, bias), rtol=1e-4, atol=1e-5)

    # 2) Non-trivial scalars to actually exercise the normalization math.
    alpha2 = jnp.full((1,), 1.5, dtype=jnp.float32)
    bias2 = jnp.full((1,), 2.0, dtype=jnp.float32)
    out2 = jax.block_until_ready(layer_normalization(x, alpha2, bias2))
    ref2 = _ref(x, alpha2, bias2)
    assert jnp.allclose(out2, ref2, rtol=1e-4, atol=1e-3), "mismatch vs reference"

    print("KERNEL_OK")
</pallas_src>

<mosaic_0001>
module attributes {stable_mosaic.version = 11 : i64} {
  func.func @_layernorm_kernel(%arg0: i32, %arg1: memref<1xf32, #tpu.memory_space<smem>>, %arg2: memref<8x128xf32, #tpu.memory_space<vmem>>, %arg3: memref<8x128xf32, #tpu.memory_space<vmem>>) attributes {dimension_semantics = [#tpu.dimension_semantics<parallel>], iteration_bounds = array<i64: 2>, scalar_prefetch = 1 : i64, scratch_operands = 0 : i64, tpu.core_type = #tpu.core_type<tc>, window_params = [{transform_indices = @transform_0, window_bounds = array<i64: 8, 128>}, {transform_indices = @transform_1, window_bounds = array<i64: 8, 128>}]} {
    %c0 = arith.constant 0 : index
    %c0_0 = arith.constant 0 : index
    %0 = vector.load %arg2[%c0, %c0_0] : memref<8x128xf32, #tpu.memory_space<vmem>>, vector<8x128xf32>
    %cst = arith.constant dense<0.000000e+00> : vector<8xf32>
    %1 = vector.multi_reduction <add>, %0, %cst [1] : vector<8x128xf32> to vector<8xf32>
    %2 = vector.shape_cast %1 : vector<8xf32> to vector<8x1xf32>
    %3 = arith.mulf %0, %0 : vector<8x128xf32>
    %cst_1 = arith.constant dense<0.000000e+00> : vector<8xf32>
    %4 = vector.multi_reduction <add>, %3, %cst_1 [1] : vector<8x128xf32> to vector<8xf32>
    %5 = vector.shape_cast %4 : vector<8xf32> to vector<8x1xf32>
    %cst_2 = arith.constant 3.125000e-02 : f32
    %6 = vector.broadcast %cst_2 : f32 to vector<8x1xf32>
    %7 = arith.mulf %2, %6 : vector<8x1xf32>
    %8 = arith.mulf %7, %2 : vector<8x1xf32>
    %9 = arith.subf %5, %8 : vector<8x1xf32>
    %cst_3 = arith.constant 0.0322580636 : f32
    %10 = vector.broadcast %cst_3 : f32 to vector<8x1xf32>
    %11 = arith.mulf %9, %10 : vector<8x1xf32>
    %cst_4 = arith.constant 0.000000e+00 : f32
    %12 = vector.broadcast %cst_4 : f32 to vector<8x1xf32>
    %13 = arith.maximumf %11, %12 : vector<8x1xf32>
    %14 = math.rsqrt %13 : vector<8x1xf32>
    %c0_5 = arith.constant 0 : index
    %15 = memref.load %arg1[%c0_5] : memref<1xf32, #tpu.memory_space<smem>>
    %16 = vector.broadcast %15 : f32 to vector<8x1xf32>
    %17 = arith.mulf %14, %16 : vector<8x1xf32>
    %18 = vector.broadcast %7 : vector<8x1xf32> to vector<8x128xf32>
    %19 = arith.subf %0, %18 : vector<8x128xf32>
    %20 = vector.broadcast %17 : vector<8x1xf32> to vector<8x128xf32>
    %21 = arith.mulf %19, %20 : vector<8x128xf32>
    %c0_6 = arith.constant 0 : index
    %c0_7 = arith.constant 0 : index
    %22 = vector.load %arg3[%c0_6, %c0_7] : memref<8x128xf32, #tpu.memory_space<vmem>>, vector<8x128xf32>
    tpu.vector_store %arg3[%c0_6, %c0_7], %21 {strides = array<i32>} : memref<8x128xf32, #tpu.memory_space<vmem>>, vector<8x128xf32>,
    return
  }
  func.func @transform_0(%arg0: i32, %arg1: memref<1xf32, #tpu.memory_space<smem>>) -> (i32, i32) {
    %c0_i32 = arith.constant 0 : i32
    %c0_i32_0 = arith.constant 0 : i32
    return %arg0, %c0_i32 : i32, i32
  }
  func.func @transform_1(%arg0: i32, %arg1: memref<1xf32, #tpu.memory_space<smem>>) -> (i32, i32) {
    %c0_i32 = arith.constant 0 : i32
    %c0_i32_0 = arith.constant 0 : i32
    return %arg0, %c0_i32 : i32, i32
  }
}

</mosaic_0001>

<llo_original>
// kernel: tpu_custom_call.1
$region0: #{tpu_custom_call.1}
  #allocation0 [shape = 'u32[]', space=smem, size = 0x4, offset = 0x4, fixed_abs, tag = 'smem constant byte address 0x4 - core index']
  #allocation1 [shape = 'u32[144,128]{1,0:T(1,128)}', space=vmem, size = 0x12000, scoped, tag = 'internal scratch']
  #allocation2 [shape = 's32[1]{0}', space=sflag, size = 0x4, scoped, tag = 'scoped memory for tpu_custom_call.1']
  #allocation3 [shape = 'f32[1]{0:T(128)S(6)}', space=smem, size = 0x200, scoped, tag = 'prefetched SMEM operand 0']
  %s0 = inlined_call_operand.<no memory space> [shape: f32[1], index: 0, kind: input, shape index: {}]
  %s1 = inlined_call_operand.hbm [shape: f32[16,128], index: 1, kind: input, shape index: {}]
  %s2 = inlined_call_operand.hbm [shape: f32[16,128], index: 2, kind: output, shape index: {}]
  %s3 = sld [smem:[#allocation0]]
  $region41: #{tpu_custom_call.1} parent=0
    _
  %s5 = ssub.s32 1, %s3
  %s6 = scalar_select 0, %s5, %s3
  %7 = sst [smem:[#allocation3]] %s0
  $region1: #{tpu_custom_call.1} parent=0
    #allocation4 [shape = 'u8[8192]{0}', space=vmem, size = 0x2000, scoped, tag = 'input window, operand 1']
    #allocation5 [shape = 's32[2]{0}', space=sflag, size = 0x8, scoped, tag = 'scoped memory for tpu_custom_call.1']
    #allocation6 [shape = 's32[2]{0}', space=sflag, size = 0x8, scoped, tag = 'scoped memory for tpu_custom_call.1']
    #allocation7 [shape = 'u8[8192]{0}', space=vmem, size = 0x2000, scoped, tag = 'output window, operand 0']
    %8 = vsyncpa [#allocation5], 0
    %s9 = scalar_lea.sflag [#allocation5], 1
    %10 = vsyncpa %s9, 0
    %11 = vsyncpa [#allocation6], 0
    %s12 = scalar_lea.sflag [#allocation6], 1
    %13 = vsyncpa %s12, 0
    loop: start=0, step=1, limit=4
    $region2: #{tpu_custom_call.1} parent=1 // loop_pre_header
      _
    $region3: #{tpu_custom_call.1} parent=1 // loop_header
      %s15 = sphi 0, %s19
      %p16 = scmp.ge.s32.totalorder %s15, 4
      %s25 = sphi 0, %s27
      %s28 = sphi 0, %s25
      %s29 = sphi 0, %s28
      %s45 = sphi 0, %s29
      %s51 = sphi 0, %s53
      %s54 = sphi 0, %s51
      %s55 = sphi 0, %s54
      %s71 = sphi 0, %s55
    $region4: #{tpu_custom_call.1} parent=1 // loop_header_branch
      %18 = sbr.rel (%p16) target = $region8
    $region5: #{tpu_custom_call.1} parent=1 // loop_body
      %s20 = ssub.s32 %s15, 1
      %s21 = ssub.s32 %s15, 2
      %s22 = sadd.s32 %s15, 1
      %s23 = ssub.s32 %s15, %s22
      %p24 = scmp.eq.s32.totalorder %s23, 0
      %s26 = sadd.s32 %s25, 1
      %s27 = scalar_select %p24, %s25, %s26
      %p30 = pneg %p24
      %p31 = scmp.eq.s32.totalorder %s15, 1
      %p32 = por %p30, %p31
      %p33 = scmp.ne.s32.totalorder %s25, %s28
      %p34 = scmp.eq.s32.totalorder %s15, 0
      %p35 = por %p33, %p34
      %p36 = scmp.ne.s32.totalorder %s25, %s28
      %p37 = scmp.eq.s32.totalorder %s20, 1
      %p38 = por %p36, %p37
      %p39 = scmp.ne.s32.totalorder %s28, %s29
      %p40 = scmp.eq.s32.totalorder %s20, 0
      %p41 = por %p39, %p40
      %p42 = scmp.ne.s32.totalorder %s28, %s29
      %p43 = scmp.eq.s32.totalorder %s21, 1
      %p44 = por %p42, %p43
      %p46 = scmp.ne.s32.totalorder %s29, %s45
      %p47 = scmp.eq.s32.totalorder %s21, 0
      %p48 = por %p46, %p47
      %s49 = ssub.s32 %s15, %s22
      %p50 = scmp.eq.s32.totalorder %s49, 0
      %s52 = sadd.s32 %s51, 1
      %s53 = scalar_select %p50, %s51, %s52
      %p56 = pneg %p50
      %p57 = scmp.eq.s32.totalorder %s15, 1
      %p58 = por %p56, %p57
      %p59 = scmp.ne.s32.totalorder %s51, %s54
      %p60 = scmp.eq.s32.totalorder %s15, 0
      %p61 = por %p59, %p60
      %p62 = scmp.ne.s32.totalorder %s51, %s54
      %p63 = scmp.eq.s32.totalorder %s20, 1
      %p64 = por %p62, %p63
      %p65 = scmp.ne.s32.totalorder %s54, %s55
      %p66 = scmp.eq.s32.totalorder %s20, 0
      %p67 = por %p65, %p66
      %p68 = scmp.ne.s32.totalorder %s54, %s55
      %p69 = scmp.eq.s32.totalorder %s21, 1
      %p70 = por %p68, %p69
      %p72 = scmp.ne.s32.totalorder %s55, %s71
      %p73 = scmp.eq.s32.totalorder %s21, 0
      %p74 = por %p72, %p73
      %p75 = scmp.le.s32.totalorder 1, %s15
      %p76 = scmp.lt.s32.totalorder %s15, 3
      %p77 = pnand %p75, %p76
      %p78 = pneg %p77
      // Predicated region
      $region9: #{tpu_custom_call.1} parent=5 // pred_check
        _
      $region10: #{tpu_custom_call.1} parent=5 // pred_check_branch
        %80 = sbr.rel (%p77) target = $region12
      $region11: #{tpu_custom_call.1} parent=5 // pred_region
        %s81 = ssub.s32 %s15, 1
      $region12: #{tpu_custom_call.1} parent=5 // pred_fallthru
        _
      %p82 = scmp.lt.s32.totalorder %s15, 2
      // Predicated region
      $region13: #{tpu_custom_call.1} parent=5 // pred_check
        %p83 = pneg %p82
      $region14: #{tpu_custom_call.1} parent=5 // pred_check_branch
        %85 = sbr.rel (%p83) target = $region16
      $region15: #{tpu_custom_call.1} parent=5 // pred_region
        // Predicated region
        $region17: #{tpu_custom_call.1} parent=15 // pred_check
          %p86 = pneg %p35
        $region18: #{tpu_custom_call.1} parent=15 // pred_check_branch
          %88 = sbr.rel (%p86) target = $region20
        $region19: #{tpu_custom_call.1} parent=15 // pred_region
          %s89 = sand.u32 %s25, 1
          %s90 = scalar_lea.sflag [#allocation5], %s89
          %s91 = sand.u32 %s25, 1
          %s92 = smul.addr %s91, 8
          %s93 = scalar_lea.vmem [#allocation4], %s92
          %s95 = ssub.s32 128, 128
          %96 = vsyncadd %s90, %s95
          %s97 = smul.addr %s15, 128
          %s98 = scalar_lea.hbm %s1, %s97
          %s100 = sshll.u32 %s93, 4
          %s101 = int_to_ptr.vmem [resolvable:$true] %s100
          %103 = dma.hbm_to_vmem [thread:$0]  %s98, 128, %s101, %s90
        $region20: #{tpu_custom_call.1} parent=15 // pred_fallthru
          _
      $region16: #{tpu_custom_call.1} parent=5 // pred_fallthru
        _
      %p104 = scmp.le.s32.totalorder 1, %s15
      %p105 = scmp.lt.s32.totalorder %s15, 3
      %p106 = pnand %p104, %p105
      %p107 = pneg %p106
      // Predicated region
      $region21: #{tpu_custom_call.1} parent=5 // pred_check
        _
      $region22: #{tpu_custom_call.1} parent=5 // pred_check_branch
        %109 = sbr.rel (%p106) target = $region24
      $region23: #{tpu_custom_call.1} parent=5 // pred_region
        %s110 = ssub.s32 %s15, 1
        %s111 = sand.u32 %s28, 1
        %s112 = scalar_lea.sflag [#allocation5], %s111
        %s113 = sand.u32 %s28, 1
        %s114 = smul.addr %s113, 8
        %s115 = scalar_lea.vmem [#allocation4], %s114
        // Predicated region
        $region25: #{tpu_custom_call.1} parent=23 // pred_check
          %p116 = pneg %p41
        $region26: #{tpu_custom_call.1} parent=23 // pred_check_branch
          %118 = sbr.rel (%p116) target = $region28
        $region27: #{tpu_custom_call.1} parent=23 // pred_region
          %119 = dma.done %s112, 128
        $region28: #{tpu_custom_call.1} parent=23 // pred_fallthru
          _
        %s120 = sand.u32 %s28, 1
        %s121 = scalar_lea.sflag [#allocation5], %s120
        %s122 = sand.u32 %s28, 1
        %s123 = smul.addr %s122, 8
        %s124 = scalar_lea.vmem [#allocation4], %s123
        %p125 = pneg %p41
        %p126 = pneg %p38
        %p127 = pneg %p67
        %p128 = pneg %p64
        %s129 = sand.u32 %s54, 1
        %s130 = scalar_lea.sflag [#allocation6], %s129
        %s131 = sand.u32 %s54, 1
        %s132 = smul.addr %s131, 8
        %s133 = scalar_lea.vmem [#allocation7], %s132
        %v134 = vld [vmem:[%s115] sm:$0xff]
        %135 = vadd.xlane.f32.xlu0 %v134
        %v136 = vpop.xlane.xlu0 %135
        %v137 = vmul.f32 %v134, %v134
        %138 = vadd.xlane.f32.xlu0 %v137
        %v139 = vpop.xlane.xlu0 %138
        %v140 = vmul.f32 %v136, 0.03125
        %v141 = vmul.f32 %v140, %v136
        %v142 = vsub.f32 %v139, %v141
        %v143 = vmul.f32 %v142, 0.032258064
        %v144 = vmax.f32 %v143, 0.0
        %v145 = vrsqrt.pop %v144
        %s146 = sld [smem:[#allocation3]]
        %v147 = vstv %s146
        %v148 = vmul.f32 %v145, %v147
        %v149 = vsub.f32 %v134, %v140
        %v150 = vmul.f32 %v149, %v148
        %151 = vst [vmem:[%s133] sm:$0xff] %v150
        %s152 = sand.u32 %s54, 1
        %s153 = scalar_lea.sflag [#allocation6], %s152
        %s154 = sand.u32 %s54, 1
        %s155 = smul.addr %s154, 8
        %s156 = scalar_lea.vmem [#allocation7], %s155
        // Predicated region
        $region29: #{tpu_custom_call.1} parent=23 // pred_check
          %p157 = pneg %p64
        $region30: #{tpu_custom_call.1} parent=23 // pred_check_branch
          %159 = sbr.rel (%p157) target = $region32
        $region31: #{tpu_custom_call.1} parent=23 // pred_region
          %s161 = ssub.s32 128, 128
          %162 = vsyncadd %s153, %s161
          %s163 = smul.addr %s20, 128
          %s164 = scalar_lea.hbm %s2, %s163
          %s166 = sshll.u32 %s156, 4
          %s167 = int_to_ptr.vmem [resolvable:$true] %s166
          %169 = dma.vmem_to_hbm [thread:$0]  %s167, 128, %s164, %s153
        $region32: #{tpu_custom_call.1} parent=23 // pred_fallthru
          _
      $region24: #{tpu_custom_call.1} parent=5 // pred_fallthru
        _
      %p170 = scmp.le.s32.totalorder 2, %s15
      // Predicated region
      $region33: #{tpu_custom_call.1} parent=5 // pred_check
        %p171 = pneg %p170
      $region34: #{tpu_custom_call.1} parent=5 // pred_check_branch
        %173 = sbr.rel (%p171) target = $region36
      $region35: #{tpu_custom_call.1} parent=5 // pred_region
        %s174 = ssub.s32 %s15, 2
        // Predicated region
        $region37: #{tpu_custom_call.1} parent=35 // pred_check
          %p175 = pneg %p70
        $region38: #{tpu_custom_call.1} parent=35 // pred_check_branch
          %177 = sbr.rel (%p175) target = $region40
        $region39: #{tpu_custom_call.1} parent=35 // pred_region
          %s178 = sand.u32 %s55, 1
          %s179 = scalar_lea.sflag [#allocation6], %s178
          %s180 = sand.u32 %s55, 1
          %s181 = smul.addr %s180, 8
          %s182 = scalar_lea.vmem [#allocation7], %s181
          %183 = dma.done %s179, 128
        $region40: #{tpu_custom_call.1} parent=35 // pred_fallthru
          _
      $region36: #{tpu_custom_call.1} parent=5 // pred_fallthru
        _
    $region6: #{tpu_custom_call.1} parent=1 // loop_footer
      %s19 = sadd.s32 1, %s15
    $region7: #{tpu_custom_call.1} parent=1 // loop_footer_branch
      %14 = sbr.rel target = $region3
    $region8: #{tpu_custom_call.1} parent=1 // loop_exit
      _
    %184 = vsyncpa [#allocation5], 1
    %s185 = scalar_lea.sflag [#allocation5], 1
    %186 = vsyncpa %s185, 1
    %187 = vsyncpa [#allocation6], 1
    %s188 = scalar_lea.sflag [#allocation6], 1
    %189 = vsyncpa %s188, 1

</llo_original>
